<compile_context>
chip_gen: v7x
topology: tpu7x:2x2x1
jax: 0.10.0
libtpu: 0.0.40
codegen_flags: <defaults>
</compile_context>

<pallas_src>
import jax
import jax.numpy as jnp
from jax import lax
from jax.experimental import pallas as pl
from jax.experimental.pallas import tpu as pltpu


_BISECT_ITERS = 30  # enough to reach f32 resolution on tau in [-1, 0]


def _sparsemax_loss_kernel(x_ref, t_ref, w_ref, o_ref):
    x = x_ref[...].astype(jnp.float32)   # (TB, C)
    t = t_ref[...].astype(jnp.float32)   # (TB, C)
    w = w_ref[...].astype(jnp.float32)   # (1, C)

    # Shift by per-row max (as in the torch code); afterwards max(z) == 0.
    z = x - jnp.max(x, axis=-1, keepdims=True)

    # --- sparsemax threshold tau via bisection ------------------------------
    # tau solves  g(tau) = sum_i max(0, z_i - tau) = 1  and lies in
    # [max(z) - 1, max(z)] = [-1, 0].  g is monotone decreasing, so ~30
    # halvings reach f32 resolution.  The support {z > tau} is then recovered
    # and tau is recomputed exactly as (sum_support - 1) / k, which matches
    # the sort+cumsum formulation up to FP rounding (boundary elements with
    # z ~= tau contribute ~0 either way).
    rows = z.shape[0]
    lo = jnp.full((rows, 1), -1.0, jnp.float32)
    hi = jnp.zeros((rows, 1), jnp.float32)

    def body(_, carry):
        lo, hi = carry
        mid = 0.5 * (lo + hi)
        gval = jnp.sum(jnp.maximum(z - mid, 0.0), axis=-1, keepdims=True)
        go_up = gval > 1.0                  # true tau lies above mid
        lo = jnp.where(go_up, mid, lo)
        hi = jnp.where(go_up, hi, mid)
        return lo, hi

    lo, hi = lax.fori_loop(0, _BISECT_ITERS, body, (lo, hi), unroll=True)
    mid = 0.5 * (lo + hi)                    # mid < 0 <= max(z)  =>  k >= 1

    cond = (z > mid).astype(jnp.float32)     # support indicator
    k = jnp.maximum(jnp.sum(cond, axis=-1, keepdims=True), 1.0)
    taus = (jnp.sum(z * cond, axis=-1, keepdims=True) - 1.0) / k

    # --- loss ---------------------------------------------------------------
    z_t2 = jnp.maximum(0.0, z * z - taus * taus)
    L = 0.5 * (z_t2 + t * t) - t * z
    L = L * w                                # broadcast (1, C)
    o_ref[...] = jnp.sum(L, axis=-1, keepdims=True)   # (TB, 1)


def _round_up(n: int, m: int) -> int:
    return ((n + m - 1) // m) * m


def _row_multiple(itemsize: int) -> int:
    # Sublane tiling: f32 -> 8, bf16 -> 16, int8/fp8 -> 32 rows.
    return 8 * max(1, 4 // max(1, itemsize))


def _choose_block_rows(batch: int, C: int, max_itemsize: int, row_mult: int) -> int:
    # 2 inputs x 2 pipeline buffers (input dtype) + ~5 live f32 temporaries.
    per_row = C * (4 * max_itemsize + 20) + 64
    budget = 12 * 1024 * 1024                # fits v5e/v6e/v7x scoped defaults
    tb = int(budget // per_row)
    tb = min(tb, 2048, _round_up(batch, row_mult))
    tb = max(row_mult, (tb // row_mult) * row_mult)
    return tb


def multi_label_sparsemax_loss(x, target, weight=None, reduction="mean",
                               block_rows=None):
    """Pallas-backed equivalent of multi_label_sparsemax (forward only)."""
    if reduction not in ("mean", "sum", "none"):
        raise ValueError(f"reduction is {reduction} not in [`mean`, `sum`, `none`]")

    x = jnp.asarray(x)
    target = jnp.asarray(target)
    if not jnp.issubdtype(x.dtype, jnp.floating):
        x = x.astype(jnp.float32)
    if not jnp.issubdtype(target.dtype, jnp.floating):
        target = target.astype(jnp.float32)

    B, C = x.shape
    max_itemsize = max(x.dtype.itemsize, target.dtype.itemsize)
    row_mult = _row_multiple(min(x.dtype.itemsize, target.dtype.itemsize))

    if block_rows is None:
        tb = _choose_block_rows(B, C, max_itemsize, row_mult)
    else:
        tb = max(row_mult, _round_up(int(block_rows), row_mult))

    b_pad = _round_up(B, tb)
    if b_pad != B:
        pad = b_pad - B
        x = jnp.pad(x, ((0, pad), (0, 0)))
        target = jnp.pad(target, ((0, pad), (0, 0)))

    if weight is None:
        w2d = jnp.ones((1, C), jnp.float32)
    else:
        w2d = jnp.asarray(weight, jnp.float32).reshape(1, C)

    loss = pl.pallas_call(
        _sparsemax_loss_kernel,
        out_shape=jax.ShapeDtypeStruct((b_pad, 1), jnp.float32),
        grid=(b_pad // tb,),
        in_specs=[
            pl.BlockSpec((tb, C), lambda i: (i, 0)),
            pl.BlockSpec((tb, C), lambda i: (i, 0)),
            pl.BlockSpec((1, C), lambda i: (0, 0)),
        ],
        out_specs=pl.BlockSpec((tb, 1), lambda i: (i, 0)),
        compiler_params=pltpu.CompilerParams(
            dimension_semantics=("parallel",),
            vmem_limit_bytes=32 * 1024 * 1024,
        ),
    )(x, target, w2d)

    loss = loss[:B, 0]
    if reduction == "mean":
        return jnp.mean(loss)
    if reduction == "sum":
        return jnp.sum(loss)
    return loss


class MultiLabelSparsemaxLoss:
    """Mirror of the torch nn.Module (forward only)."""

    def __init__(self, weight=None, reduction="mean"):
        self.weight = weight
        self.reduction = reduction

    def __call__(self, input, target):
        return multi_label_sparsemax_loss(
            input, target, weight=self.weight, reduction=self.reduction
        )


def _reference_loss(x, t, w, reduction="mean"):
    """Pure-JAX transliteration of the torch forward (sort + cumsum)."""
    x = x.astype(jnp.float32)
    t = t.astype(jnp.float32)
    C = x.shape[-1]
    x = x - jnp.max(x, axis=-1, keepdims=True)
    zs = -jnp.sort(-x, axis=-1)                      # descending sort
    rng = jnp.arange(1, C + 1, dtype=jnp.float32)[None, :]
    bound = 1.0 + rng * zs
    is_gt = (bound > jnp.cumsum(zs, axis=-1)).astype(jnp.float32)
    k = jnp.max(is_gt * rng, axis=-1, keepdims=True)
    taus = (jnp.sum(is_gt * zs, axis=-1, keepdims=True) - 1.0) / k
    z_t2 = jnp.maximum(jnp.zeros_like(x), x * x - taus * taus)
    L = 0.5 * (z_t2 + t * t) - t * x
    if w is not None:
        L = L * jnp.asarray(w, jnp.float32)[None, :]
    loss = jnp.sum(L, axis=1)
    if reduction == "mean":
        return jnp.mean(loss)
    elif reduction == "sum":
        return jnp.sum(loss)
    return loss


if __name__ == "__main__":
    key = jax.random.PRNGKey(0)
    k1, k2, k3, k4 = jax.random.split(key, 4)

    # Case 1: small f32 problem, weighted, mean reduction.
    B, C = 4, 16
    x = jax.random.normal(k1, (B, C), dtype=jnp.float32)
    target = jax.random.uniform(k2, (B, C), dtype=jnp.float32)
    weight = jnp.linspace(0.5, 1.5, C, dtype=jnp.float32)

    module = MultiLabelSparsemaxLoss(weight=weight, reduction="mean")
    out = jax.block_until_ready(module(x, target))
    ref = _reference_loss(x, target, weight, reduction="mean")
    assert jnp.allclose(out, ref, rtol=1e-5, atol=1e-5), (out, ref)

    # Case 2: bf16 inputs (no wrapper upcast -> bf16 DMA), no weight,
    # reduction='none', multi-tile grid with batch padding (B % TB != 0).
    B2, C2 = 40, 256
    x2 = jax.random.normal(k3, (B2, C2), dtype=jnp.float32).astype(jnp.bfloat16)
    t2 = jax.random.uniform(k4, (B2, C2), dtype=jnp.float32).astype(jnp.bfloat16)
    out2 = jax.block_until_ready(
        multi_label_sparsemax_loss(x2, t2, weight=None, reduction="none",
                                   block_rows=16))
    ref2 = _reference_loss(x2.astype(jnp.float32), t2.astype(jnp.float32),
                           None, reduction="none")
    assert out2.shape == (B2,)
    assert jnp.allclose(out2, ref2, rtol=5e-4, atol=1e-3), (out2, ref2)

    print("KERNEL_OK")
</pallas_src>

<mosaic_0001>
module attributes {stable_mosaic.version = 11 : i64} {
  func.func @_sparsemax_loss_kernel(%arg0: i32, %arg1: memref<8x16xf32, #tpu.memory_space<vmem>>, %arg2: memref<8x16xf32, #tpu.memory_space<vmem>>, %arg3: memref<1x16xf32, #tpu.memory_space<vmem>>, %arg4: memref<8x1xf32, #tpu.memory_space<vmem>>) attributes {dimension_semantics = [#tpu.dimension_semantics<parallel>], iteration_bounds = array<i64: 1>, scalar_prefetch = 0 : i64, scratch_operands = 0 : i64, tpu.core_type = #tpu.core_type<tc>, window_params = [{transform_indices = @transform_0, window_bounds = array<i64: 8, 16>}, {transform_indices = @transform_1, window_bounds = array<i64: 8, 16>}, {pipeline_mode = #tpu.pipeline_mode<synchronous>, transform_indices = @transform_2, window_bounds = array<i64: 1, 16>}, {transform_indices = @transform_3, window_bounds = array<i64: 8, 1>}]} {
    %c0 = arith.constant 0 : index
    %c0_0 = arith.constant 0 : index
    %0 = vector.load %arg1[%c0, %c0_0] : memref<8x16xf32, #tpu.memory_space<vmem>>, vector<8x16xf32>
    %c0_1 = arith.constant 0 : index
    %c0_2 = arith.constant 0 : index
    %1 = vector.load %arg2[%c0_1, %c0_2] : memref<8x16xf32, #tpu.memory_space<vmem>>, vector<8x16xf32>
    %c0_3 = arith.constant 0 : index
    %c0_4 = arith.constant 0 : index
    %2 = vector.load %arg3[%c0_3, %c0_4] : memref<1x16xf32, #tpu.memory_space<vmem>>, vector<1x16xf32>
    %cst = arith.constant dense<0xFF800000> : vector<8xf32>
    %3 = vector.multi_reduction <maximumf>, %0, %cst [1] : vector<8x16xf32> to vector<8xf32>
    %4 = vector.shape_cast %3 : vector<8xf32> to vector<8x1xf32>
    %5 = vector.broadcast %4 : vector<8x1xf32> to vector<8x16xf32>
    %6 = arith.subf %0, %5 : vector<8x16xf32>
    %cst_5 = arith.constant -1.000000e+00 : f32
    %7 = vector.broadcast %cst_5 : f32 to vector<8x1xf32>
    %cst_6 = arith.constant 0.000000e+00 : f32
    %8 = vector.broadcast %cst_6 : f32 to vector<8x1xf32>
    %c0_i32 = arith.constant 0 : i32
    %9 = arith.addf %7, %8 : vector<8x1xf32>
    %cst_7 = arith.constant 5.000000e-01 : f32
    %10 = vector.broadcast %cst_7 : f32 to vector<8x1xf32>
    %11 = arith.mulf %10, %9 : vector<8x1xf32>
    %12 = vector.broadcast %11 : vector<8x1xf32> to vector<8x16xf32>
    %13 = arith.subf %6, %12 : vector<8x16xf32>
    %cst_8 = arith.constant 0.000000e+00 : f32
    %14 = vector.broadcast %cst_8 : f32 to vector<8x16xf32>
    %15 = arith.maximumf %13, %14 : vector<8x16xf32>
    %cst_9 = arith.constant dense<0.000000e+00> : vector<8xf32>
    %16 = vector.multi_reduction <add>, %15, %cst_9 [1] : vector<8x16xf32> to vector<8xf32>
    %17 = vector.shape_cast %16 : vector<8xf32> to vector<8x1xf32>
    %cst_10 = arith.constant 1.000000e+00 : f32
    %18 = vector.broadcast %cst_10 : f32 to vector<8x1xf32>
    %19 = arith.cmpf ogt, %17, %18 : vector<8x1xf32>
    %20 = arith.select %19, %11, %7 : vector<8x1xi1>, vector<8x1xf32>
    %21 = arith.select %19, %8, %11 : vector<8x1xi1>, vector<8x1xf32>
    %c1_i32 = arith.constant 1 : i32
    %22 = arith.addf %20, %21 : vector<8x1xf32>
    %cst_11 = arith.constant 5.000000e-01 : f32
    %23 = vector.broadcast %cst_11 : f32 to vector<8x1xf32>
    %24 = arith.mulf %23, %22 : vector<8x1xf32>
    %25 = vector.broadcast %24 : vector<8x1xf32> to vector<8x16xf32>
    %26 = arith.subf %6, %25 : vector<8x16xf32>
    %cst_12 = arith.constant 0.000000e+00 : f32
    %27 = vector.broadcast %cst_12 : f32 to vector<8x16xf32>
    %28 = arith.maximumf %26, %27 : vector<8x16xf32>
    %cst_13 = arith.constant dense<0.000000e+00> : vector<8xf32>
    %29 = vector.multi_reduction <add>, %28, %cst_13 [1] : vector<8x16xf32> to vector<8xf32>
    %30 = vector.shape_cast %29 : vector<8xf32> to vector<8x1xf32>
    %cst_14 = arith.constant 1.000000e+00 : f32
    %31 = vector.broadcast %cst_14 : f32 to vector<8x1xf32>
    %32 = arith.cmpf ogt, %30, %31 : vector<8x1xf32>
    %33 = arith.select %32, %24, %20 : vector<8x1xi1>, vector<8x1xf32>
    %34 = arith.select %32, %21, %24 : vector<8x1xi1>, vector<8x1xf32>
    %c2_i32 = arith.constant 2 : i32
    %35 = arith.addf %33, %34 : vector<8x1xf32>
    %cst_15 = arith.constant 5.000000e-01 : f32
    %36 = vector.broadcast %cst_15 : f32 to vector<8x1xf32>
    %37 = arith.mulf %36, %35 : vector<8x1xf32>
    %38 = vector.broadcast %37 : vector<8x1xf32> to vector<8x16xf32>
    %39 = arith.subf %6, %38 : vector<8x16xf32>
    %cst_16 = arith.constant 0.000000e+00 : f32
    %40 = vector.broadcast %cst_16 : f32 to vector<8x16xf32>
    %41 = arith.maximumf %39, %40 : vector<8x16xf32>
    %cst_17 = arith.constant dense<0.000000e+00> : vector<8xf32>
    %42 = vector.multi_reduction <add>, %41, %cst_17 [1] : vector<8x16xf32> to vector<8xf32>
    %43 = vector.shape_cast %42 : vector<8xf32> to vector<8x1xf32>
    %cst_18 = arith.constant 1.000000e+00 : f32
    %44 = vector.broadcast %cst_18 : f32 to vector<8x1xf32>
    %45 = arith.cmpf ogt, %43, %44 : vector<8x1xf32>
    %46 = arith.select %45, %37, %33 : vector<8x1xi1>, vector<8x1xf32>
    %47 = arith.select %45, %34, %37 : vector<8x1xi1>, vector<8x1xf32>
    %c3_i32 = arith.constant 3 : i32
    %48 = arith.addf %46, %47 : vector<8x1xf32>
    %cst_19 = arith.constant 5.000000e-01 : f32
    %49 = vector.broadcast %cst_19 : f32 to vector<8x1xf32>
    %50 = arith.mulf %49, %48 : vector<8x1xf32>
    %51 = vector.broadcast %50 : vector<8x1xf32> to vector<8x16xf32>
    %52 = arith.subf %6, %51 : vector<8x16xf32>
    %cst_20 = arith.constant 0.000000e+00 : f32
    %53 = vector.broadcast %cst_20 : f32 to vector<8x16xf32>
    %54 = arith.maximumf %52, %53 : vector<8x16xf32>
    %cst_21 = arith.constant dense<0.000000e+00> : vector<8xf32>
    %55 = vector.multi_reduction <add>, %54, %cst_21 [1] : vector<8x16xf32> to vector<8xf32>
    %56 = vector.shape_cast %55 : vector<8xf32> to vector<8x1xf32>
    %cst_22 = arith.constant 1.000000e+00 : f32
    %57 = vector.broadcast %cst_22 : f32 to vector<8x1xf32>
    %58 = arith.cmpf ogt, %56, %57 : vector<8x1xf32>
    %59 = arith.select %58, %50, %46 : vector<8x1xi1>, vector<8x1xf32>
    %60 = arith.select %58, %47, %50 : vector<8x1xi1>, vector<8x1xf32>
    %c4_i32 = arith.constant 4 : i32
    %61 = arith.addf %59, %60 : vector<8x1xf32>
    %cst_23 = arith.constant 5.000000e-01 : f32
    %62 = vector.broadcast %cst_23 : f32 to vector<8x1xf32>
    %63 = arith.mulf %62, %61 : vector<8x1xf32>
    %64 = vector.broadcast %63 : vector<8x1xf32> to vector<8x16xf32>
    %65 = arith.subf %6, %64 : vector<8x16xf32>
    %cst_24 = arith.constant 0.000000e+00 : f32
    %66 = vector.broadcast %cst_24 : f32 to vector<8x16xf32>
    %67 = arith.maximumf %65, %66 : vector<8x16xf32>
    %cst_25 = arith.constant dense<0.000000e+00> : vector<8xf32>
    %68 = vector.multi_reduction <add>, %67, %cst_25 [1] : vector<8x16xf32> to vector<8xf32>
    %69 = vector.shape_cast %68 : vector<8xf32> to vector<8x1xf32>
    %cst_26 = arith.constant 1.000000e+00 : f32
    %70 = vector.broadcast %cst_26 : f32 to vector<8x1xf32>
    %71 = arith.cmpf ogt, %69, %70 : vector<8x1xf32>
    %72 = arith.select %71, %63, %59 : vector<8x1xi1>, vector<8x1xf32>
    %73 = arith.select %71, %60, %63 : vector<8x1xi1>, vector<8x1xf32>
    %c5_i32 = arith.constant 5 : i32
    %74 = arith.addf %72, %73 : vector<8x1xf32>
    %cst_27 = arith.constant 5.000000e-01 : f32
    %75 = vector.broadcast %cst_27 : f32 to vector<8x1xf32>
    %76 = arith.mulf %75, %74 : vector<8x1xf32>
    %77 = vector.broadcast %76 : vector<8x1xf32> to vector<8x16xf32>
    %78 = arith.subf %6, %77 : vector<8x16xf32>
    %cst_28 = arith.constant 0.000000e+00 : f32
    %79 = vector.broadcast %cst_28 : f32 to vector<8x16xf32>
    %80 = arith.maximumf %78, %79 : vector<8x16xf32>
    %cst_29 = arith.constant dense<0.000000e+00> : vector<8xf32>
    %81 = vector.multi_reduction <add>, %80, %cst_29 [1] : vector<8x16xf32> to vector<8xf32>
    %82 = vector.shape_cast %81 : vector<8xf32> to vector<8x1xf32>
    %cst_30 = arith.constant 1.000000e+00 : f32
    %83 = vector.broadcast %cst_30 : f32 to vector<8x1xf32>
    %84 = arith.cmpf ogt, %82, %83 : vector<8x1xf32>
    %85 = arith.select %84, %76, %72 : vector<8x1xi1>, vector<8x1xf32>
    %86 = arith.select %84, %73, %76 : vector<8x1xi1>, vector<8x1xf32>
    %c6_i32 = arith.constant 6 : i32
    %87 = arith.addf %85, %86 : vector<8x1xf32>
    %cst_31 = arith.constant 5.000000e-01 : f32
    %88 = vector.broadcast %cst_31 : f32 to vector<8x1xf32>
    %89 = arith.mulf %88, %87 : vector<8x1xf32>
    %90 = vector.broadcast %89 : vector<8x1xf32> to vector<8x16xf32>
    %91 = arith.subf %6, %90 : vector<8x16xf32>
    %cst_32 = arith.constant 0.000000e+00 : f32
    %92 = vector.broadcast %cst_32 : f32 to vector<8x16xf32>
    %93 = arith.maximumf %91, %92 : vector<8x16xf32>
    %cst_33 = arith.constant dense<0.000000e+00> : vector<8xf32>
    %94 = vector.multi_reduction <add>, %93, %cst_33 [1] : vector<8x16xf32> to vector<8xf32>
    %95 = vector.shape_cast %94 : vector<8xf32> to vector<8x1xf32>
    %cst_34 = arith.constant 1.000000e+00 : f32
    %96 = vector.broadcast %cst_34 : f32 to vector<8x1xf32>
    %97 = arith.cmpf ogt, %95, %96 : vector<8x1xf32>
    %98 = arith.select %97, %89, %85 : vector<8x1xi1>, vector<8x1xf32>
    %99 = arith.select %97, %86, %89 : vector<8x1xi1>, vector<8x1xf32>
    %c7_i32 = arith.constant 7 : i32
    %100 = arith.addf %98, %99 : vector<8x1xf32>
    %cst_35 = arith.constant 5.000000e-01 : f32
    %101 = vector.broadcast %cst_35 : f32 to vector<8x1xf32>
    %102 = arith.mulf %101, %100 : vector<8x1xf32>
    %103 = vector.broadcast %102 : vector<8x1xf32> to vector<8x16xf32>
    %104 = arith.subf %6, %103 : vector<8x16xf32>
    %cst_36 = arith.constant 0.000000e+00 : f32
    %105 = vector.broadcast %cst_36 : f32 to vector<8x16xf32>
    %106 = arith.maximumf %104, %105 : vector<8x16xf32>
    %cst_37 = arith.constant dense<0.000000e+00> : vector<8xf32>
    %107 = vector.multi_reduction <add>, %106, %cst_37 [1] : vector<8x16xf32> to vector<8xf32>
    %108 = vector.shape_cast %107 : vector<8xf32> to vector<8x1xf32>
    %cst_38 = arith.constant 1.000000e+00 : f32
    %109 = vector.broadcast %cst_38 : f32 to vector<8x1xf32>
    %110 = arith.cmpf ogt, %108, %109 : vector<8x1xf32>
    %111 = arith.select %110, %102, %98 : vector<8x1xi1>, vector<8x1xf32>
    %112 = arith.select %110, %99, %102 : vector<8x1xi1>, vector<8x1xf32>
    %c8_i32 = arith.constant 8 : i32
    %113 = arith.addf %111, %112 : vector<8x1xf32>
    %cst_39 = arith.constant 5.000000e-01 : f32
    %114 = vector.broadcast %cst_39 : f32 to vector<8x1xf32>
    %115 = arith.mulf %114, %113 : vector<8x1xf32>
    %116 = vector.broadcast %115 : vector<8x1xf32> to vector<8x16xf32>
    %117 = arith.subf %6, %116 : vector<8x16xf32>
    %cst_40 = arith.constant 0.000000e+00 : f32
    %118 = vector.broadcast %cst_40 : f32 to vector<8x16xf32>
    %119 = arith.maximumf %117, %118 : vector<8x16xf32>
    %cst_41 = arith.constant dense<0.000000e+00> : vector<8xf32>
    %120 = vector.multi_reduction <add>, %119, %cst_41 [1] : vector<8x16xf32> to vector<8xf32>
    %121 = vector.shape_cast %120 : vector<8xf32> to vector<8x1xf32>
    %cst_42 = arith.constant 1.000000e+00 : f32
    %122 = vector.broadcast %cst_42 : f32 to vector<8x1xf32>
    %123 = arith.cmpf ogt, %121, %122 : vector<8x1xf32>
    %124 = arith.select %123, %115, %111 : vector<8x1xi1>, vector<8x1xf32>
    %125 = arith.select %123, %112, %115 : vector<8x1xi1>, vector<8x1xf32>
    %c9_i32 = arith.constant 9 : i32
    %126 = arith.addf %124, %125 : vector<8x1xf32>
    %cst_43 = arith.constant 5.000000e-01 : f32
    %127 = vector.broadcast %cst_43 : f32 to vector<8x1xf32>
    %128 = arith.mulf %127, %126 : vector<8x1xf32>
    %129 = vector.broadcast %128 : vector<8x1xf32> to vector<8x16xf32>
    %130 = arith.subf %6, %129 : vector<8x16xf32>
    %cst_44 = arith.constant 0.000000e+00 : f32
    %131 = vector.broadcast %cst_44 : f32 to vector<8x16xf32>
    %132 = arith.maximumf %130, %131 : vector<8x16xf32>
    %cst_45 = arith.constant dense<0.000000e+00> : vector<8xf32>
    %133 = vector.multi_reduction <add>, %132, %cst_45 [1] : vector<8x16xf32> to vector<8xf32>
    %134 = vector.shape_cast %133 : vector<8xf32> to vector<8x1xf32>
    %cst_46 = arith.constant 1.000000e+00 : f32
    %135 = vector.broadcast %cst_46 : f32 to vector<8x1xf32>
    %136 = arith.cmpf ogt, %134, %135 : vector<8x1xf32>
    %137 = arith.select %136, %128, %124 : vector<8x1xi1>, vector<8x1xf32>
    %138 = arith.select %136, %125, %128 : vector<8x1xi1>, vector<8x1xf32>
    %c10_i32 = arith.constant 10 : i32
    %139 = arith.addf %137, %138 : vector<8x1xf32>
    %cst_47 = arith.constant 5.000000e-01 : f32
    %140 = vector.broadcast %cst_47 : f32 to vector<8x1xf32>
    %141 = arith.mulf %140, %139 : vector<8x1xf32>
    %142 = vector.broadcast %141 : vector<8x1xf32> to vector<8x16xf32>
    %143 = arith.subf %6, %142 : vector<8x16xf32>
    %cst_48 = arith.constant 0.000000e+00 : f32
    %144 = vector.broadcast %cst_48 : f32 to vector<8x16xf32>
    %145 = arith.maximumf %143, %144 : vector<8x16xf32>
    %cst_49 = arith.constant dense<0.000000e+00> : vector<8xf32>
    %146 = vector.multi_reduction <add>, %145, %cst_49 [1] : vector<8x16xf32> to vector<8xf32>
    %147 = vector.shape_cast %146 : vector<8xf32> to vector<8x1xf32>
    %cst_50 = arith.constant 1.000000e+00 : f32
    %148 = vector.broadcast %cst_50 : f32 to vector<8x1xf32>
    %149 = arith.cmpf ogt, %147, %148 : vector<8x1xf32>
    %150 = arith.select %149, %141, %137 : vector<8x1xi1>, vector<8x1xf32>
    %151 = arith.select %149, %138, %141 : vector<8x1xi1>, vector<8x1xf32>
    %c11_i32 = arith.constant 11 : i32
    %152 = arith.addf %150, %151 : vector<8x1xf32>
    %cst_51 = arith.constant 5.000000e-01 : f32
    %153 = vector.broadcast %cst_51 : f32 to vector<8x1xf32>
    %154 = arith.mulf %153, %152 : vector<8x1xf32>
    %155 = vector.broadcast %154 : vector<8x1xf32> to vector<8x16xf32>
    %156 = arith.subf %6, %155 : vector<8x16xf32>
    %cst_52 = arith.constant 0.000000e+00 : f32
    %157 = vector.broadcast %cst_52 : f32 to vector<8x16xf32>
    %158 = arith.maximumf %156, %157 : vector<8x16xf32>
    %cst_53 = arith.constant dense<0.000000e+00> : vector<8xf32>
    %159 = vector.multi_reduction <add>, %158, %cst_53 [1] : vector<8x16xf32> to vector<8xf32>
    %160 = vector.shape_cast %159 : vector<8xf32> to vector<8x1xf32>
    %cst_54 = arith.constant 1.000000e+00 : f32
    %161 = vector.broadcast %cst_54 : f32 to vector<8x1xf32>
    %162 = arith.cmpf ogt, %160, %161 : vector<8x1xf32>
    %163 = arith.select %162, %154, %150 : vector<8x1xi1>, vector<8x1xf32>
    %164 = arith.select %162, %151, %154 : vector<8x1xi1>, vector<8x1xf32>
    %c12_i32 = arith.constant 12 : i32
    %165 = arith.addf %163, %164 : vector<8x1xf32>
    %cst_55 = arith.constant 5.000000e-01 : f32
    %166 = vector.broadcast %cst_55 : f32 to vector<8x1xf32>
    %167 = arith.mulf %166, %165 : vector<8x1xf32>
    %168 = vector.broadcast %167 : vector<8x1xf32> to vector<8x16xf32>
    %169 = arith.subf %6, %168 : vector<8x16xf32>
    %cst_56 = arith.constant 0.000000e+00 : f32
    %170 = vector.broadcast %cst_56 : f32 to vector<8x16xf32>
    %171 = arith.maximumf %169, %170 : vector<8x16xf32>
    %cst_57 = arith.constant dense<0.000000e+00> : vector<8xf32>
    %172 = vector.multi_reduction <add>, %171, %cst_57 [1] : vector<8x16xf32> to vector<8xf32>
    %173 = vector.shape_cast %172 : vector<8xf32> to vector<8x1xf32>
    %cst_58 = arith.constant 1.000000e+00 : f32
    %174 = vector.broadcast %cst_58 : f32 to vector<8x1xf32>
    %175 = arith.cmpf ogt, %173, %174 : vector<8x1xf32>
    %176 = arith.select %175, %167, %163 : vector<8x1xi1>, vector<8x1xf32>
    %177 = arith.select %175, %164, %167 : vector<8x1xi1>, vector<8x1xf32>
    %c13_i32 = arith.constant 13 : i32
    %178 = arith.addf %176, %177 : vector<8x1xf32>
    %cst_59 = arith.constant 5.000000e-01 : f32
    %179 = vector.broadcast %cst_59 : f32 to vector<8x1xf32>
    %180 = arith.mulf %179, %178 : vector<8x1xf32>
    %181 = vector.broadcast %180 : vector<8x1xf32> to vector<8x16xf32>
    %182 = arith.subf %6, %181 : vector<8x16xf32>
    %cst_60 = arith.constant 0.000000e+00 : f32
    %183 = vector.broadcast %cst_60 : f32 to vector<8x16xf32>
    %184 = arith.maximumf %182, %183 : vector<8x16xf32>
    %cst_61 = arith.constant dense<0.000000e+00> : vector<8xf32>
    %185 = vector.multi_reduction <add>, %184, %cst_61 [1] : vector<8x16xf32> to vector<8xf32>
    %186 = vector.shape_cast %185 : vector<8xf32> to vector<8x1xf32>
    %cst_62 = arith.constant 1.000000e+00 : f32
    %187 = vector.broadcast %cst_62 : f32 to vector<8x1xf32>
    %188 = arith.cmpf ogt, %186, %187 : vector<8x1xf32>
    %189 = arith.select %188, %180, %176 : vector<8x1xi1>, vector<8x1xf32>
    %190 = arith.select %188, %177, %180 : vector<8x1xi1>, vector<8x1xf32>
    %c14_i32 = arith.constant 14 : i32
    %191 = arith.addf %189, %190 : vector<8x1xf32>
    %cst_63 = arith.constant 5.000000e-01 : f32
    %192 = vector.broadcast %cst_63 : f32 to vector<8x1xf32>
    %193 = arith.mulf %192, %191 : vector<8x1xf32>
    %194 = vector.broadcast %193 : vector<8x1xf32> to vector<8x16xf32>
    %195 = arith.subf %6, %194 : vector<8x16xf32>
    %cst_64 = arith.constant 0.000000e+00 : f32
    %196 = vector.broadcast %cst_64 : f32 to vector<8x16xf32>
    %197 = arith.maximumf %195, %196 : vector<8x16xf32>
    %cst_65 = arith.constant dense<0.000000e+00> : vector<8xf32>
    %198 = vector.multi_reduction <add>, %197, %cst_65 [1] : vector<8x16xf32> to vector<8xf32>
    %199 = vector.shape_cast %198 : vector<8xf32> to vector<8x1xf32>
    %cst_66 = arith.constant 1.000000e+00 : f32
    %200 = vector.broadcast %cst_66 : f32 to vector<8x1xf32>
    %201 = arith.cmpf ogt, %199, %200 : vector<8x1xf32>
    %202 = arith.select %201, %193, %189 : vector<8x1xi1>, vector<8x1xf32>
    %203 = arith.select %201, %190, %193 : vector<8x1xi1>, vector<8x1xf32>
    %c15_i32 = arith.constant 15 : i32
    %204 = arith.addf %202, %203 : vector<8x1xf32>
    %cst_67 = arith.constant 5.000000e-01 : f32
    %205 = vector.broadcast %cst_67 : f32 to vector<8x1xf32>
    %206 = arith.mulf %205, %204 : vector<8x1xf32>
    %207 = vector.broadcast %206 : vector<8x1xf32> to vector<8x16xf32>
    %208 = arith.subf %6, %207 : vector<8x16xf32>
    %cst_68 = arith.constant 0.000000e+00 : f32
    %209 = vector.broadcast %cst_68 : f32 to vector<8x16xf32>
    %210 = arith.maximumf %208, %209 : vector<8x16xf32>
    %cst_69 = arith.constant dense<0.000000e+00> : vector<8xf32>
    %211 = vector.multi_reduction <add>, %210, %cst_69 [1] : vector<8x16xf32> to vector<8xf32>
    %212 = vector.shape_cast %211 : vector<8xf32> to vector<8x1xf32>
    %cst_70 = arith.constant 1.000000e+00 : f32
    %213 = vector.broadcast %cst_70 : f32 to vector<8x1xf32>
    %214 = arith.cmpf ogt, %212, %213 : vector<8x1xf32>
    %215 = arith.select %214, %206, %202 : vector<8x1xi1>, vector<8x1xf32>
    %216 = arith.select %214, %203, %206 : vector<8x1xi1>, vector<8x1xf32>
    %c16_i32 = arith.constant 16 : i32
    %217 = arith.addf %215, %216 : vector<8x1xf32>
    %cst_71 = arith.constant 5.000000e-01 : f32
    %218 = vector.broadcast %cst_71 : f32 to vector<8x1xf32>
    %219 = arith.mulf %218, %217 : vector<8x1xf32>
    %220 = vector.broadcast %219 : vector<8x1xf32> to vector<8x16xf32>
    %221 = arith.subf %6, %220 : vector<8x16xf32>
    %cst_72 = arith.constant 0.000000e+00 : f32
    %222 = vector.broadcast %cst_72 : f32 to vector<8x16xf32>
    %223 = arith.maximumf %221, %222 : vector<8x16xf32>
    %cst_73 = arith.constant dense<0.000000e+00> : vector<8xf32>
    %224 = vector.multi_reduction <add>, %223, %cst_73 [1] : vector<8x16xf32> to vector<8xf32>
    %225 = vector.shape_cast %224 : vector<8xf32> to vector<8x1xf32>
    %cst_74 = arith.constant 1.000000e+00 : f32
    %226 = vector.broadcast %cst_74 : f32 to vector<8x1xf32>
    %227 = arith.cmpf ogt, %225, %226 : vector<8x1xf32>
    %228 = arith.select %227, %219, %215 : vector<8x1xi1>, vector<8x1xf32>
    %229 = arith.select %227, %216, %219 : vector<8x1xi1>, vector<8x1xf32>
    %c17_i32 = arith.constant 17 : i32
    %230 = arith.addf %228, %229 : vector<8x1xf32>
    %cst_75 = arith.constant 5.000000e-01 : f32
    %231 = vector.broadcast %cst_75 : f32 to vector<8x1xf32>
    %232 = arith.mulf %231, %230 : vector<8x1xf32>
    %233 = vector.broadcast %232 : vector<8x1xf32> to vector<8x16xf32>
    %234 = arith.subf %6, %233 : vector<8x16xf32>
    %cst_76 = arith.constant 0.000000e+00 : f32
    %235 = vector.broadcast %cst_76 : f32 to vector<8x16xf32>
    %236 = arith.maximumf %234, %235 : vector<8x16xf32>
    %cst_77 = arith.constant dense<0.000000e+00> : vector<8xf32>
    %237 = vector.multi_reduction <add>, %236, %cst_77 [1] : vector<8x16xf32> to vector<8xf32>
    %238 = vector.shape_cast %237 : vector<8xf32> to vector<8x1xf32>
    %cst_78 = arith.constant 1.000000e+00 : f32
    %239 = vector.broadcast %cst_78 : f32 to vector<8x1xf32>
    %240 = arith.cmpf ogt, %238, %239 : vector<8x1xf32>
    %241 = arith.select %240, %232, %228 : vector<8x1xi1>, vector<8x1xf32>
    %242 = arith.select %240, %229, %232 : vector<8x1xi1>, vector<8x1xf32>
    %c18_i32 = arith.constant 18 : i32
    %243 = arith.addf %241, %242 : vector<8x1xf32>
    %cst_79 = arith.constant 5.000000e-01 : f32
    %244 = vector.broadcast %cst_79 : f32 to vector<8x1xf32>
    %245 = arith.mulf %244, %243 : vector<8x1xf32>
    %246 = vector.broadcast %245 : vector<8x1xf32> to vector<8x16xf32>
    %247 = arith.subf %6, %246 : vector<8x16xf32>
    %cst_80 = arith.constant 0.000000e+00 : f32
    %248 = vector.broadcast %cst_80 : f32 to vector<8x16xf32>
    %249 = arith.maximumf %247, %248 : vector<8x16xf32>
    %cst_81 = arith.constant dense<0.000000e+00> : vector<8xf32>
    %250 = vector.multi_reduction <add>, %249, %cst_81 [1] : vector<8x16xf32> to vector<8xf32>
    %251 = vector.shape_cast %250 : vector<8xf32> to vector<8x1xf32>
    %cst_82 = arith.constant 1.000000e+00 : f32
    %252 = vector.broadcast %cst_82 : f32 to vector<8x1xf32>
    %253 = arith.cmpf ogt, %251, %252 : vector<8x1xf32>
    %254 = arith.select %253, %245, %241 : vector<8x1xi1>, vector<8x1xf32>
    %255 = arith.select %253, %242, %245 : vector<8x1xi1>, vector<8x1xf32>
    %c19_i32 = arith.constant 19 : i32
    %256 = arith.addf %254, %255 : vector<8x1xf32>
    %cst_83 = arith.constant 5.000000e-01 : f32
    %257 = vector.broadcast %cst_83 : f32 to vector<8x1xf32>
    %258 = arith.mulf %257, %256 : vector<8x1xf32>
    %259 = vector.broadcast %258 : vector<8x1xf32> to vector<8x16xf32>
    %260 = arith.subf %6, %259 : vector<8x16xf32>
    %cst_84 = arith.constant 0.000000e+00 : f32
    %261 = vector.broadcast %cst_84 : f32 to vector<8x16xf32>
    %262 = arith.maximumf %260, %261 : vector<8x16xf32>
    %cst_85 = arith.constant dense<0.000000e+00> : vector<8xf32>
    %263 = vector.multi_reduction <add>, %262, %cst_85 [1] : vector<8x16xf32> to vector<8xf32>
    %264 = vector.shape_cast %263 : vector<8xf32> to vector<8x1xf32>
    %cst_86 = arith.constant 1.000000e+00 : f32
    %265 = vector.broadcast %cst_86 : f32 to vector<8x1xf32>
    %266 = arith.cmpf ogt, %264, %265 : vector<8x1xf32>
    %267 = arith.select %266, %258, %254 : vector<8x1xi1>, vector<8x1xf32>
    %268 = arith.select %266, %255, %258 : vector<8x1xi1>, vector<8x1xf32>
    %c20_i32 = arith.constant 20 : i32
    %269 = arith.addf %267, %268 : vector<8x1xf32>
    %cst_87 = arith.constant 5.000000e-01 : f32
    %270 = vector.broadcast %cst_87 : f32 to vector<8x1xf32>
    %271 = arith.mulf %270, %269 : vector<8x1xf32>
    %272 = vector.broadcast %271 : vector<8x1xf32> to vector<8x16xf32>
    %273 = arith.subf %6, %272 : vector<8x16xf32>
    %cst_88 = arith.constant 0.000000e+00 : f32
    %274 = vector.broadcast %cst_88 : f32 to vector<8x16xf32>
    %275 = arith.maximumf %273, %274 : vector<8x16xf32>
    %cst_89 = arith.constant dense<0.000000e+00> : vector<8xf32>
    %276 = vector.multi_reduction <add>, %275, %cst_89 [1] : vector<8x16xf32> to vector<8xf32>
    %277 = vector.shape_cast %276 : vector<8xf32> to vector<8x1xf32>
    %cst_90 = arith.constant 1.000000e+00 : f32
    %278 = vector.broadcast %cst_90 : f32 to vector<8x1xf32>
    %279 = arith.cmpf ogt, %277, %278 : vector<8x1xf32>
    %280 = arith.select %279, %271, %267 : vector<8x1xi1>, vector<8x1xf32>
    %281 = arith.select %279, %268, %271 : vector<8x1xi1>, vector<8x1xf32>
    %c21_i32 = arith.constant 21 : i32
    %282 = arith.addf %280, %281 : vector<8x1xf32>
    %cst_91 = arith.constant 5.000000e-01 : f32
    %283 = vector.broadcast %cst_91 : f32 to vector<8x1xf32>
    %284 = arith.mulf %283, %282 : vector<8x1xf32>
    %285 = vector.broadcast %284 : vector<8x1xf32> to vector<8x16xf32>
    %286 = arith.subf %6, %285 : vector<8x16xf32>
    %cst_92 = arith.constant 0.000000e+00 : f32
    %287 = vector.broadcast %cst_92 : f32 to vector<8x16xf32>
    %288 = arith.maximumf %286, %287 : vector<8x16xf32>
    %cst_93 = arith.constant dense<0.000000e+00> : vector<8xf32>
    %289 = vector.multi_reduction <add>, %288, %cst_93 [1] : vector<8x16xf32> to vector<8xf32>
    %290 = vector.shape_cast %289 : vector<8xf32> to vector<8x1xf32>
    %cst_94 = arith.constant 1.000000e+00 : f32
    %291 = vector.broadcast %cst_94 : f32 to vector<8x1xf32>
    %292 = arith.cmpf ogt, %290, %291 : vector<8x1xf32>
    %293 = arith.select %292, %284, %280 : vector<8x1xi1>, vector<8x1xf32>
    %294 = arith.select %292, %281, %284 : vector<8x1xi1>, vector<8x1xf32>
    %c22_i32 = arith.constant 22 : i32
    %295 = arith.addf %293, %294 : vector<8x1xf32>
    %cst_95 = arith.constant 5.000000e-01 : f32
    %296 = vector.broadcast %cst_95 : f32 to vector<8x1xf32>
    %297 = arith.mulf %296, %295 : vector<8x1xf32>
    %298 = vector.broadcast %297 : vector<8x1xf32> to vector<8x16xf32>
    %299 = arith.subf %6, %298 : vector<8x16xf32>
    %cst_96 = arith.constant 0.000000e+00 : f32
    %300 = vector.broadcast %cst_96 : f32 to vector<8x16xf32>
    %301 = arith.maximumf %299, %300 : vector<8x16xf32>
    %cst_97 = arith.constant dense<0.000000e+00> : vector<8xf32>
    %302 = vector.multi_reduction <add>, %301, %cst_97 [1] : vector<8x16xf32> to vector<8xf32>
    %303 = vector.shape_cast %302 : vector<8xf32> to vector<8x1xf32>
    %cst_98 = arith.constant 1.000000e+00 : f32
    %304 = vector.broadcast %cst_98 : f32 to vector<8x1xf32>
    %305 = arith.cmpf ogt, %303, %304 : vector<8x1xf32>
    %306 = arith.select %305, %297, %293 : vector<8x1xi1>, vector<8x1xf32>
    %307 = arith.select %305, %294, %297 : vector<8x1xi1>, vector<8x1xf32>
    %c23_i32 = arith.constant 23 : i32
    %308 = arith.addf %306, %307 : vector<8x1xf32>
    %cst_99 = arith.constant 5.000000e-01 : f32
    %309 = vector.broadcast %cst_99 : f32 to vector<8x1xf32>
    %310 = arith.mulf %309, %308 : vector<8x1xf32>
    %311 = vector.broadcast %310 : vector<8x1xf32> to vector<8x16xf32>
    %312 = arith.subf %6, %311 : vector<8x16xf32>
    %cst_100 = arith.constant 0.000000e+00 : f32
    %313 = vector.broadcast %cst_100 : f32 to vector<8x16xf32>
    %314 = arith.maximumf %312, %313 : vector<8x16xf32>
    %cst_101 = arith.constant dense<0.000000e+00> : vector<8xf32>
    %315 = vector.multi_reduction <add>, %314, %cst_101 [1] : vector<8x16xf32> to vector<8xf32>
    %316 = vector.shape_cast %315 : vector<8xf32> to vector<8x1xf32>
    %cst_102 = arith.constant 1.000000e+00 : f32
    %317 = vector.broadcast %cst_102 : f32 to vector<8x1xf32>
    %318 = arith.cmpf ogt, %316, %317 : vector<8x1xf32>
    %319 = arith.select %318, %310, %306 : vector<8x1xi1>, vector<8x1xf32>
    %320 = arith.select %318, %307, %310 : vector<8x1xi1>, vector<8x1xf32>
    %c24_i32 = arith.constant 24 : i32
    %321 = arith.addf %319, %320 : vector<8x1xf32>
    %cst_103 = arith.constant 5.000000e-01 : f32
    %322 = vector.broadcast %cst_103 : f32 to vector<8x1xf32>
    %323 = arith.mulf %322, %321 : vector<8x1xf32>
    %324 = vector.broadcast %323 : vector<8x1xf32> to vector<8x16xf32>
    %325 = arith.subf %6, %324 : vector<8x16xf32>
    %cst_104 = arith.constant 0.000000e+00 : f32
    %326 = vector.broadcast %cst_104 : f32 to vector<8x16xf32>
    %327 = arith.maximumf %325, %326 : vector<8x16xf32>
    %cst_105 = arith.constant dense<0.000000e+00> : vector<8xf32>
    %328 = vector.multi_reduction <add>, %327, %cst_105 [1] : vector<8x16xf32> to vector<8xf32>
    %329 = vector.shape_cast %328 : vector<8xf32> to vector<8x1xf32>
    %cst_106 = arith.constant 1.000000e+00 : f32
    %330 = vector.broadcast %cst_106 : f32 to vector<8x1xf32>
    %331 = arith.cmpf ogt, %329, %330 : vector<8x1xf32>
    %332 = arith.select %331, %323, %319 : vector<8x1xi1>, vector<8x1xf32>
    %333 = arith.select %331, %320, %323 : vector<8x1xi1>, vector<8x1xf32>
    %c25_i32 = arith.constant 25 : i32
    %334 = arith.addf %332, %333 : vector<8x1xf32>
    %cst_107 = arith.constant 5.000000e-01 : f32
    %335 = vector.broadcast %cst_107 : f32 to vector<8x1xf32>
    %336 = arith.mulf %335, %334 : vector<8x1xf32>
    %337 = vector.broadcast %336 : vector<8x1xf32> to vector<8x16xf32>
    %338 = arith.subf %6, %337 : vector<8x16xf32>
    %cst_108 = arith.constant 0.000000e+00 : f32
    %339 = vector.broadcast %cst_108 : f32 to vector<8x16xf32>
    %340 = arith.maximumf %338, %339 : vector<8x16xf32>
    %cst_109 = arith.constant dense<0.000000e+00> : vector<8xf32>
    %341 = vector.multi_reduction <add>, %340, %cst_109 [1] : vector<8x16xf32> to vector<8xf32>
    %342 = vector.shape_cast %341 : vector<8xf32> to vector<8x1xf32>
    %cst_110 = arith.constant 1.000000e+00 : f32
    %343 = vector.broadcast %cst_110 : f32 to vector<8x1xf32>
    %344 = arith.cmpf ogt, %342, %343 : vector<8x1xf32>
    %345 = arith.select %344, %336, %332 : vector<8x1xi1>, vector<8x1xf32>
    %346 = arith.select %344, %333, %336 : vector<8x1xi1>, vector<8x1xf32>
    %c26_i32 = arith.constant 26 : i32
    %347 = arith.addf %345, %346 : vector<8x1xf32>
    %cst_111 = arith.constant 5.000000e-01 : f32
    %348 = vector.broadcast %cst_111 : f32 to vector<8x1xf32>
    %349 = arith.mulf %348, %347 : vector<8x1xf32>
    %350 = vector.broadcast %349 : vector<8x1xf32> to vector<8x16xf32>
    %351 = arith.subf %6, %350 : vector<8x16xf32>
    %cst_112 = arith.constant 0.000000e+00 : f32
    %352 = vector.broadcast %cst_112 : f32 to vector<8x16xf32>
    %353 = arith.maximumf %351, %352 : vector<8x16xf32>
    %cst_113 = arith.constant dense<0.000000e+00> : vector<8xf32>
    %354 = vector.multi_reduction <add>, %353, %cst_113 [1] : vector<8x16xf32> to vector<8xf32>
    %355 = vector.shape_cast %354 : vector<8xf32> to vector<8x1xf32>
    %cst_114 = arith.constant 1.000000e+00 : f32
    %356 = vector.broadcast %cst_114 : f32 to vector<8x1xf32>
    %357 = arith.cmpf ogt, %355, %356 : vector<8x1xf32>
    %358 = arith.select %357, %349, %345 : vector<8x1xi1>, vector<8x1xf32>
    %359 = arith.select %357, %346, %349 : vector<8x1xi1>, vector<8x1xf32>
    %c27_i32 = arith.constant 27 : i32
    %360 = arith.addf %358, %359 : vector<8x1xf32>
    %cst_115 = arith.constant 5.000000e-01 : f32
    %361 = vector.broadcast %cst_115 : f32 to vector<8x1xf32>
    %362 = arith.mulf %361, %360 : vector<8x1xf32>
    %363 = vector.broadcast %362 : vector<8x1xf32> to vector<8x16xf32>
    %364 = arith.subf %6, %363 : vector<8x16xf32>
    %cst_116 = arith.constant 0.000000e+00 : f32
    %365 = vector.broadcast %cst_116 : f32 to vector<8x16xf32>
    %366 = arith.maximumf %364, %365 : vector<8x16xf32>
    %cst_117 = arith.constant dense<0.000000e+00> : vector<8xf32>
    %367 = vector.multi_reduction <add>, %366, %cst_117 [1] : vector<8x16xf32> to vector<8xf32>
    %368 = vector.shape_cast %367 : vector<8xf32> to vector<8x1xf32>
    %cst_118 = arith.constant 1.000000e+00 : f32
    %369 = vector.broadcast %cst_118 : f32 to vector<8x1xf32>
    %370 = arith.cmpf ogt, %368, %369 : vector<8x1xf32>
    %371 = arith.select %370, %362, %358 : vector<8x1xi1>, vector<8x1xf32>
    %372 = arith.select %370, %359, %362 : vector<8x1xi1>, vector<8x1xf32>
    %c28_i32 = arith.constant 28 : i32
    %373 = arith.addf %371, %372 : vector<8x1xf32>
    %cst_119 = arith.constant 5.000000e-01 : f32
    %374 = vector.broadcast %cst_119 : f32 to vector<8x1xf32>
    %375 = arith.mulf %374, %373 : vector<8x1xf32>
    %376 = vector.broadcast %375 : vector<8x1xf32> to vector<8x16xf32>
    %377 = arith.subf %6, %376 : vector<8x16xf32>
    %cst_120 = arith.constant 0.000000e+00 : f32
    %378 = vector.broadcast %cst_120 : f32 to vector<8x16xf32>
    %379 = arith.maximumf %377, %378 : vector<8x16xf32>
    %cst_121 = arith.constant dense<0.000000e+00> : vector<8xf32>
    %380 = vector.multi_reduction <add>, %379, %cst_121 [1] : vector<8x16xf32> to vector<8xf32>
    %381 = vector.shape_cast %380 : vector<8xf32> to vector<8x1xf32>
    %cst_122 = arith.constant 1.000000e+00 : f32
    %382 = vector.broadcast %cst_122 : f32 to vector<8x1xf32>
    %383 = arith.cmpf ogt, %381, %382 : vector<8x1xf32>
    %384 = arith.select %383, %375, %371 : vector<8x1xi1>, vector<8x1xf32>
    %385 = arith.select %383, %372, %375 : vector<8x1xi1>, vector<8x1xf32>
    %c29_i32 = arith.constant 29 : i32
    %386 = arith.addf %384, %385 : vector<8x1xf32>
    %cst_123 = arith.constant 5.000000e-01 : f32
    %387 = vector.broadcast %cst_123 : f32 to vector<8x1xf32>
    %388 = arith.mulf %387, %386 : vector<8x1xf32>
    %389 = vector.broadcast %388 : vector<8x1xf32> to vector<8x16xf32>
    %390 = arith.subf %6, %389 : vector<8x16xf32>
    %cst_124 = arith.constant 0.000000e+00 : f32
    %391 = vector.broadcast %cst_124 : f32 to vector<8x16xf32>
    %392 = arith.maximumf %390, %391 : vector<8x16xf32>
    %cst_125 = arith.constant dense<0.000000e+00> : vector<8xf32>
    %393 = vector.multi_reduction <add>, %392, %cst_125 [1] : vector<8x16xf32> to vector<8xf32>
    %394 = vector.shape_cast %393 : vector<8xf32> to vector<8x1xf32>
    %cst_126 = arith.constant 1.000000e+00 : f32
    %395 = vector.broadcast %cst_126 : f32 to vector<8x1xf32>
    %396 = arith.cmpf ogt, %394, %395 : vector<8x1xf32>
    %397 = arith.select %396, %388, %384 : vector<8x1xi1>, vector<8x1xf32>
    %398 = arith.select %396, %385, %388 : vector<8x1xi1>, vector<8x1xf32>
    %399 = arith.addf %397, %398 : vector<8x1xf32>
    %cst_127 = arith.constant 5.000000e-01 : f32
    %400 = vector.broadcast %cst_127 : f32 to vector<8x1xf32>
    %401 = arith.mulf %400, %399 : vector<8x1xf32>
    %402 = vector.broadcast %401 : vector<8x1xf32> to vector<8x16xf32>
    %403 = arith.cmpf ogt, %6, %402 : vector<8x16xf32>
    %404 = arith.extui %403 : vector<8x16xi1> to vector<8x16xi32>
    %405 = arith.sitofp %404 : vector<8x16xi32> to vector<8x16xf32>
    %cst_128 = arith.constant dense<0.000000e+00> : vector<8xf32>
    %406 = vector.multi_reduction <add>, %405, %cst_128 [1] : vector<8x16xf32> to vector<8xf32>
    %407 = vector.shape_cast %406 : vector<8xf32> to vector<8x1xf32>
    %cst_129 = arith.constant 1.000000e+00 : f32
    %408 = vector.broadcast %cst_129 : f32 to vector<8x1xf32>
    %409 = arith.maximumf %407, %408 : vector<8x1xf32>
    %410 = arith.mulf %6, %405 : vector<8x16xf32>
    %cst_130 = arith.constant dense<0.000000e+00> : vector<8xf32>
    %411 = vector.multi_reduction <add>, %410, %cst_130 [1] : vector<8x16xf32> to vector<8xf32>
    %412 = vector.shape_cast %411 : vector<8xf32> to vector<8x1xf32>
    %cst_131 = arith.constant 1.000000e+00 : f32
    %413 = vector.broadcast %cst_131 : f32 to vector<8x1xf32>
    %414 = arith.subf %412, %413 : vector<8x1xf32>
    %415 = arith.divf %414, %409 : vector<8x1xf32>
    %416 = arith.mulf %6, %6 : vector<8x16xf32>
    %417 = arith.mulf %415, %415 : vector<8x1xf32>
    %418 = vector.broadcast %417 : vector<8x1xf32> to vector<8x16xf32>
    %419 = arith.subf %416, %418 : vector<8x16xf32>
    %cst_132 = arith.constant 0.000000e+00 : f32
    %420 = vector.broadcast %cst_132 : f32 to vector<8x16xf32>
    %421 = arith.maximumf %420, %419 : vector<8x16xf32>
    %422 = arith.mulf %1, %1 : vector<8x16xf32>
    %423 = arith.addf %421, %422 : vector<8x16xf32>
    %cst_133 = arith.constant 5.000000e-01 : f32
    %424 = vector.broadcast %cst_133 : f32 to vector<8x16xf32>
    %425 = arith.mulf %424, %423 : vector<8x16xf32>
    %426 = arith.mulf %1, %6 : vector<8x16xf32>
    %427 = arith.subf %425, %426 : vector<8x16xf32>
    %428 = vector.broadcast %2 : vector<1x16xf32> to vector<8x16xf32>
    %429 = arith.mulf %427, %428 : vector<8x16xf32>
    %cst_134 = arith.constant dense<0.000000e+00> : vector<8xf32>
    %430 = vector.multi_reduction <add>, %429, %cst_134 [1] : vector<8x16xf32> to vector<8xf32>
    %431 = vector.shape_cast %430 : vector<8xf32> to vector<8x1xf32>
    %c0_135 = arith.constant 0 : index
    %c0_136 = arith.constant 0 : index
    %432 = vector.load %arg4[%c0_135, %c0_136] : memref<8x1xf32, #tpu.memory_space<vmem>>, vector<8x1xf32>
    tpu.vector_store %arg4[%c0_135, %c0_136], %431 {strides = array<i32>} : memref<8x1xf32, #tpu.memory_space<vmem>>, vector<8x1xf32>,
    return
  }
  func.func @transform_0(%arg0: i32) -> (i32, i32) {
    %c0_i32 = arith.constant 0 : i32
    %c0_i32_0 = arith.constant 0 : i32
    return %arg0, %c0_i32 : i32, i32
  }
  func.func @transform_1(%arg0: i32) -> (i32, i32) {
    %c0_i32 = arith.constant 0 : i32
    %c0_i32_0 = arith.constant 0 : i32
    return %arg0, %c0_i32 : i32, i32
  }
  func.func @transform_2(%arg0: i32) -> (i32, i32) {
    %c0_i32 = arith.constant 0 : i32
    %c0_i32_0 = arith.constant 0 : i32
    %c0_i32_1 = arith.constant 0 : i32
    return %c0_i32, %c0_i32_0 : i32, i32
  }
  func.func @transform_3(%arg0: i32) -> (i32, i32) {
    %c0_i32 = arith.constant 0 : i32
    %c0_i32_0 = arith.constant 0 : i32
    return %arg0, %c0_i32 : i32, i32
  }
}

</mosaic_0001>

<llo_original>
// kernel: tpu_custom_call.1
$region0: #{tpu_custom_call.1}
  #allocation0 [shape = 'u32[]', space=smem, size = 0x4, offset = 0x4, fixed_abs, tag = 'smem constant byte address 0x4 - core index']
  #allocation1 [shape = 'u32[144,128]{1,0:T(1,128)}', space=vmem, size = 0x12000, scoped, tag = 'internal scratch']
  %s0 = inlined_call_operand.hbm [shape: f32[8,16], index: 0, kind: input, shape index: {}]
  %s1 = inlined_call_operand.hbm [shape: f32[8,16], index: 1, kind: input, shape index: {}]
  %s2 = inlined_call_operand.vmem [shape: f32[1,16], index: 2, kind: input, shape index: {}]
  %s3 = inlined_call_operand.vmem [shape: f32[8,1], index: 3, kind: output, shape index: {}]
  %s4 = sld [smem:[#allocation0]]
  $region30: #{tpu_custom_call.1} parent=0
    _
  %s6 = ssub.s32 1, %s4
  %s7 = scalar_select 0, %s6, %s4
  $region1: #{tpu_custom_call.1} parent=0
    #allocation2 [shape = 'u8[4096]{0}', space=vmem, size = 0x1000, scoped, tag = 'input window, operand 0, single buffered']
    #allocation3 [shape = 's32[1]{0}', space=sflag, size = 0x4, scoped, tag = 'scoped memory for tpu_custom_call.1']
    #allocation4 [shape = 'u8[4096]{0}', space=vmem, size = 0x1000, scoped, tag = 'input window, operand 1, single buffered']
    #allocation5 [shape = 's32[1]{0}', space=sflag, size = 0x4, scoped, tag = 'scoped memory for tpu_custom_call.1']
    %8 = vsyncpa [#allocation3], 0
    %9 = vsyncpa [#allocation5], 0
    // Predicated region
    $region2: #{tpu_custom_call.1} parent=1 // pred_check
      _
    $region3: #{tpu_custom_call.1} parent=1 // pred_check_branch
      %11 = sbr.rel (0) target = $region5
    $region4: #{tpu_custom_call.1} parent=1 // pred_region
      %s13 = ssub.s32 128, 128
      %14 = vsyncadd [#allocation3], %s13
      %s16 = sshll.u32 [#allocation2], 4
      %s17 = int_to_ptr.vmem [resolvable:$true] %s16
      %19 = dma.hbm_to_vmem [thread:$0]  %s0, 128, %s17, [#allocation3]
    $region5: #{tpu_custom_call.1} parent=1 // pred_fallthru
      _
    // Predicated region
    $region6: #{tpu_custom_call.1} parent=1 // pred_check
      _
    $region7: #{tpu_custom_call.1} parent=1 // pred_check_branch
      %21 = sbr.rel (0) target = $region9
    $region8: #{tpu_custom_call.1} parent=1 // pred_region
      %s23 = ssub.s32 128, 128
      %24 = vsyncadd [#allocation5], %s23
      %s26 = sshll.u32 [#allocation4], 4
      %s27 = int_to_ptr.vmem [resolvable:$true] %s26
      %29 = dma.hbm_to_vmem [thread:$0]  %s1, 128, %s27, [#allocation5]
    $region9: #{tpu_custom_call.1} parent=1 // pred_fallthru
      _
    // Predicated region
    $region10: #{tpu_custom_call.1} parent=1 // pred_check
      _
    $region11: #{tpu_custom_call.1} parent=1 // pred_check_branch
      %31 = sbr.rel (0) target = $region13
    $region12: #{tpu_custom_call.1} parent=1 // pred_region
      _
    $region13: #{tpu_custom_call.1} parent=1 // pred_fallthru
      _
    // Predicated region
    $region14: #{tpu_custom_call.1} parent=1 // pred_check
      _
    $region15: #{tpu_custom_call.1} parent=1 // pred_check_branch
      %33 = sbr.rel (0) target = $region17
    $region16: #{tpu_custom_call.1} parent=1 // pred_region
      %34 = dma.done [#allocation3], 128
    $region17: #{tpu_custom_call.1} parent=1 // pred_fallthru
      _
    // Predicated region
    $region18: #{tpu_custom_call.1} parent=1 // pred_check
      _
    $region19: #{tpu_custom_call.1} parent=1 // pred_check_branch
      %36 = sbr.rel (0) target = $region21
    $region20: #{tpu_custom_call.1} parent=1 // pred_region
      %37 = dma.done [#allocation5], 128
    $region21: #{tpu_custom_call.1} parent=1 // pred_fallthru
      _
    %v38 = vld [vmem:[#allocation2] sm:$0xff]
    %v39 = vld [vmem:[#allocation4] sm:$0xff]
    %v40 = vld [vmem:[%s2] sm:$0x1]
    %vm41 = vcmask 130048
    %v42 = vsel %vm41, %v38, -inf
    %43 = vmax.xlane.f32.xlu0 %v42
    %v44 = vpop.xlane.xlu0 %43
    %v45 = vsub.f32 %v38, %v44
    %v46 = vsub.f32 %v45, -0.5
    %v47 = vmax.f32 %v46, 0.0
    %v48 = vsel %vm41, %v47, 0.0
    %49 = vadd.xlane.f32.xlu0 %v48
    %v50 = vpop.xlane.xlu0 %49
    %vm51 = vcmp.gt.f32.partialorder %v50, 1.0
    %v52 = vsel %vm51, -0.5, -1.0
    %v53 = vsel %vm51, 0.0, -0.5
    %v54 = vadd.f32 %v52, %v53
    %v55 = vmul.f32 %v54, 0.5
    %v56 = vsub.f32 %v45, %v55
    %v57 = vmax.f32 %v56, 0.0
    %v58 = vsel %vm41, %v57, 0.0
    %59 = vadd.xlane.f32.xlu0 %v58
    %v60 = vpop.xlane.xlu0 %59
    %vm61 = vcmp.gt.f32.partialorder %v60, 1.0
    %v62 = vsel %vm61, %v55, %v52
    %v63 = vsel %vm61, %v53, %v55
    %v64 = vadd.f32 %v62, %v63
    %v65 = vmul.f32 %v64, 0.5
    %v66 = vsub.f32 %v45, %v65
    %v67 = vmax.f32 %v66, 0.0
    %v68 = vsel %vm41, %v67, 0.0
    %69 = vadd.xlane.f32.xlu0 %v68
    %v70 = vpop.xlane.xlu0 %69
    %vm71 = vcmp.gt.f32.partialorder %v70, 1.0
    %v72 = vsel %vm71, %v65, %v62
    %v73 = vsel %vm71, %v63, %v65
    %v74 = vadd.f32 %v72, %v73
    %v75 = vmul.f32 %v74, 0.5
    %v76 = vsub.f32 %v45, %v75
    %v77 = vmax.f32 %v76, 0.0
    %v78 = vsel %vm41, %v77, 0.0
    %79 = vadd.xlane.f32.xlu0 %v78
    %v80 = vpop.xlane.xlu0 %79
    %vm81 = vcmp.gt.f32.partialorder %v80, 1.0
    %v82 = vsel %vm81, %v75, %v72
    %v83 = vsel %vm81, %v73, %v75
    %v84 = vadd.f32 %v82, %v83
    %v85 = vmul.f32 %v84, 0.5
    %v86 = vsub.f32 %v45, %v85
    %v87 = vmax.f32 %v86, 0.0
    %v88 = vsel %vm41, %v87, 0.0
    %89 = vadd.xlane.f32.xlu0 %v88
    %v90 = vpop.xlane.xlu0 %89
    %vm91 = vcmp.gt.f32.partialorder %v90, 1.0
    %v92 = vsel %vm91, %v85, %v82
    %v93 = vsel %vm91, %v83, %v85
    %v94 = vadd.f32 %v92, %v93
    %v95 = vmul.f32 %v94, 0.5
    %v96 = vsub.f32 %v45, %v95
    %v97 = vmax.f32 %v96, 0.0
    %v98 = vsel %vm41, %v97, 0.0
    %99 = vadd.xlane.f32.xlu0 %v98
    %v100 = vpop.xlane.xlu0 %99
    %vm101 = vcmp.gt.f32.partialorder %v100, 1.0
    %v102 = vsel %vm101, %v95, %v92
    %v103 = vsel %vm101, %v93, %v95
    %v104 = vadd.f32 %v102, %v103
    %v105 = vmul.f32 %v104, 0.5
    %v106 = vsub.f32 %v45, %v105
    %v107 = vmax.f32 %v106, 0.0
    %v108 = vsel %vm41, %v107, 0.0
    %109 = vadd.xlane.f32.xlu0 %v108
    %v110 = vpop.xlane.xlu0 %109
    %vm111 = vcmp.gt.f32.partialorder %v110, 1.0
    %v112 = vsel %vm111, %v105, %v102
    %v113 = vsel %vm111, %v103, %v105
    %v114 = vadd.f32 %v112, %v113
    %v115 = vmul.f32 %v114, 0.5
    %v116 = vsub.f32 %v45, %v115
    %v117 = vmax.f32 %v116, 0.0
    %v118 = vsel %vm41, %v117, 0.0
    %119 = vadd.xlane.f32.xlu0 %v118
    %v120 = vpop.xlane.xlu0 %119
    %vm121 = vcmp.gt.f32.partialorder %v120, 1.0
    %v122 = vsel %vm121, %v115, %v112
    %v123 = vsel %vm121, %v113, %v115
    %v124 = vadd.f32 %v122, %v123
    %v125 = vmul.f32 %v124, 0.5
    %v126 = vsub.f32 %v45, %v125
    %v127 = vmax.f32 %v126, 0.0
    %v128 = vsel %vm41, %v127, 0.0
    %129 = vadd.xlane.f32.xlu0 %v128
    %v130 = vpop.xlane.xlu0 %129
    %vm131 = vcmp.gt.f32.partialorder %v130, 1.0
    %v132 = vsel %vm131, %v125, %v122
    %v133 = vsel %vm131, %v123, %v125
    %v134 = vadd.f32 %v132, %v133
    %v135 = vmul.f32 %v134, 0.5
    %v136 = vsub.f32 %v45, %v135
    %v137 = vmax.f32 %v136, 0.0
    %v138 = vsel %vm41, %v137, 0.0
    %139 = vadd.xlane.f32.xlu0 %v138
    %v140 = vpop.xlane.xlu0 %139
    %vm141 = vcmp.gt.f32.partialorder %v140, 1.0
    %v142 = vsel %vm141, %v135, %v132
    %v143 = vsel %vm141, %v133, %v135
    %v144 = vadd.f32 %v142, %v143
    %v145 = vmul.f32 %v144, 0.5
    %v146 = vsub.f32 %v45, %v145
    %v147 = vmax.f32 %v146, 0.0
    %v148 = vsel %vm41, %v147, 0.0
    %149 = vadd.xlane.f32.xlu0 %v148
    %v150 = vpop.xlane.xlu0 %149
    %vm151 = vcmp.gt.f32.partialorder %v150, 1.0
    %v152 = vsel %vm151, %v145, %v142
    %v153 = vsel %vm151, %v143, %v145
    %v154 = vadd.f32 %v152, %v153
    %v155 = vmul.f32 %v154, 0.5
    %v156 = vsub.f32 %v45, %v155
    %v157 = vmax.f32 %v156, 0.0
    %v158 = vsel %vm41, %v157, 0.0
    %159 = vadd.xlane.f32.xlu0 %v158
    %v160 = vpop.xlane.xlu0 %159
    %vm161 = vcmp.gt.f32.partialorder %v160, 1.0
    %v162 = vsel %vm161, %v155, %v152
    %v163 = vsel %vm161, %v153, %v155
    %v164 = vadd.f32 %v162, %v163
    %v165 = vmul.f32 %v164, 0.5
    %v166 = vsub.f32 %v45, %v165
    %v167 = vmax.f32 %v166, 0.0
    %v168 = vsel %vm41, %v167, 0.0
    %169 = vadd.xlane.f32.xlu0 %v168
    %v170 = vpop.xlane.xlu0 %169
    %vm171 = vcmp.gt.f32.partialorder %v170, 1.0
    %v172 = vsel %vm171, %v165, %v162
    %v173 = vsel %vm171, %v163, %v165
    %v174 = vadd.f32 %v172, %v173
    %v175 = vmul.f32 %v174, 0.5
    %v176 = vsub.f32 %v45, %v175
    %v177 = vmax.f32 %v176, 0.0
    %v178 = vsel %vm41, %v177, 0.0
    %179 = vadd.xlane.f32.xlu0 %v178
    %v180 = vpop.xlane.xlu0 %179
    %vm181 = vcmp.gt.f32.partialorder %v180, 1.0
    %v182 = vsel %vm181, %v175, %v172
    %v183 = vsel %vm181, %v173, %v175
    %v184 = vadd.f32 %v182, %v183
    %v185 = vmul.f32 %v184, 0.5
    %v186 = vsub.f32 %v45, %v185
    %v187 = vmax.f32 %v186, 0.0
    %v188 = vsel %vm41, %v187, 0.0
    %189 = vadd.xlane.f32.xlu0 %v188
    %v190 = vpop.xlane.xlu0 %189
    %vm191 = vcmp.gt.f32.partialorder %v190, 1.0
    %v192 = vsel %vm191, %v185, %v182
    %v193 = vsel %vm191, %v183, %v185
    %v194 = vadd.f32 %v192, %v193
    %v195 = vmul.f32 %v194, 0.5
    %v196 = vsub.f32 %v45, %v195
    %v197 = vmax.f32 %v196, 0.0
    %v198 = vsel %vm41, %v197, 0.0
    %199 = vadd.xlane.f32.xlu0 %v198
    %v200 = vpop.xlane.xlu0 %199
    %vm201 = vcmp.gt.f32.partialorder %v200, 1.0
    %v202 = vsel %vm201, %v195, %v192
    %v203 = vsel %vm201, %v193, %v195
    %v204 = vadd.f32 %v202, %v203
    %v205 = vmul.f32 %v204, 0.5
    %v206 = vsub.f32 %v45, %v205
    %v207 = vmax.f32 %v206, 0.0
    %v208 = vsel %vm41, %v207, 0.0
    %209 = vadd.xlane.f32.xlu0 %v208
    %v210 = vpop.xlane.xlu0 %209
    %vm211 = vcmp.gt.f32.partialorder %v210, 1.0
    %v212 = vsel %vm211, %v205, %v202
    %v213 = vsel %vm211, %v203, %v205
    %v214 = vadd.f32 %v212, %v213
    %v215 = vmul.f32 %v214, 0.5
    %v216 = vsub.f32 %v45, %v215
    %v217 = vmax.f32 %v216, 0.0
    %v218 = vsel %vm41, %v217, 0.0
    %219 = vadd.xlane.f32.xlu0 %v218
    %v220 = vpop.xlane.xlu0 %219
    %vm221 = vcmp.gt.f32.partialorder %v220, 1.0
    %v222 = vsel %vm221, %v215, %v212
    %v223 = vsel %vm221, %v213, %v215
    %v224 = vadd.f32 %v222, %v223
    %v225 = vmul.f32 %v224, 0.5
    %v226 = vsub.f32 %v45, %v225
    %v227 = vmax.f32 %v226, 0.0
    %v228 = vsel %vm41, %v227, 0.0
    %229 = vadd.xlane.f32.xlu0 %v228
    %v230 = vpop.xlane.xlu0 %229
    %vm231 = vcmp.gt.f32.partialorder %v230, 1.0
    %v232 = vsel %vm231, %v225, %v222
    %v233 = vsel %vm231, %v223, %v225
    %v234 = vadd.f32 %v232, %v233
    %v235 = vmul.f32 %v234, 0.5
    %v236 = vsub.f32 %v45, %v235
    %v237 = vmax.f32 %v236, 0.0
    %v238 = vsel %vm41, %v237, 0.0
    %239 = vadd.xlane.f32.xlu0 %v238
    %v240 = vpop.xlane.xlu0 %239
    %vm241 = vcmp.gt.f32.partialorder %v240, 1.0
    %v242 = vsel %vm241, %v235, %v232
    %v243 = vsel %vm241, %v233, %v235
    %v244 = vadd.f32 %v242, %v243
    %v245 = vmul.f32 %v244, 0.5
    %v246 = vsub.f32 %v45, %v245
    %v247 = vmax.f32 %v246, 0.0
    %v248 = vsel %vm41, %v247, 0.0
    %249 = vadd.xlane.f32.xlu0 %v248
    %v250 = vpop.xlane.xlu0 %249
    %vm251 = vcmp.gt.f32.partialorder %v250, 1.0
    %v252 = vsel %vm251, %v245, %v242
    %v253 = vsel %vm251, %v243, %v245
    %v254 = vadd.f32 %v252, %v253
    %v255 = vmul.f32 %v254, 0.5
    %v256 = vsub.f32 %v45, %v255
    %v257 = vmax.f32 %v256, 0.0
    %v258 = vsel %vm41, %v257, 0.0
    %259 = vadd.xlane.f32.xlu0 %v258
    %v260 = vpop.xlane.xlu0 %259
    %vm261 = vcmp.gt.f32.partialorder %v260, 1.0
    %v262 = vsel %vm261, %v255, %v252
    %v263 = vsel %vm261, %v253, %v255
    %v264 = vadd.f32 %v262, %v263
    %v265 = vmul.f32 %v264, 0.5
    %v266 = vsub.f32 %v45, %v265
    %v267 = vmax.f32 %v266, 0.0
    %v268 = vsel %vm41, %v267, 0.0
    %269 = vadd.xlane.f32.xlu0 %v268
    %v270 = vpop.xlane.xlu0 %269
    %vm271 = vcmp.gt.f32.partialorder %v270, 1.0
    %v272 = vsel %vm271, %v265, %v262
    %v273 = vsel %vm271, %v263, %v265
    %v274 = vadd.f32 %v272, %v273
    %v275 = vmul.f32 %v274, 0.5
    %v276 = vsub.f32 %v45, %v275
    %v277 = vmax.f32 %v276, 0.0
    %v278 = vsel %vm41, %v277, 0.0
    %279 = vadd.xlane.f32.xlu0 %v278
    %v280 = vpop.xlane.xlu0 %279
    %vm281 = vcmp.gt.f32.partialorder %v280, 1.0
    %v282 = vsel %vm281, %v275, %v272
    %v283 = vsel %vm281, %v273, %v275
    %v284 = vadd.f32 %v282, %v283
    %v285 = vmul.f32 %v284, 0.5
    %v286 = vsub.f32 %v45, %v285
    %v287 = vmax.f32 %v286, 0.0
    %v288 = vsel %vm41, %v287, 0.0
    %289 = vadd.xlane.f32.xlu0 %v288
    %v290 = vpop.xlane.xlu0 %289
    %vm291 = vcmp.gt.f32.partialorder %v290, 1.0
    %v292 = vsel %vm291, %v285, %v282
    %v293 = vsel %vm291, %v283, %v285
    %v294 = vadd.f32 %v292, %v293
    %v295 = vmul.f32 %v294, 0.5
    %v296 = vsub.f32 %v45, %v295
    %v297 = vmax.f32 %v296, 0.0
    %v298 = vsel %vm41, %v297, 0.0
    %299 = vadd.xlane.f32.xlu0 %v298
    %v300 = vpop.xlane.xlu0 %299
    %vm301 = vcmp.gt.f32.partialorder %v300, 1.0
    %v302 = vsel %vm301, %v295, %v292
    %v303 = vsel %vm301, %v293, %v295
    %v304 = vadd.f32 %v302, %v303
    %v305 = vmul.f32 %v304, 0.5
    %v306 = vsub.f32 %v45, %v305
    %v307 = vmax.f32 %v306, 0.0
    %v308 = vsel %vm41, %v307, 0.0
    %309 = vadd.xlane.f32.xlu0 %v308
    %v310 = vpop.xlane.xlu0 %309
    %vm311 = vcmp.gt.f32.partialorder %v310, 1.0
    %v312 = vsel %vm311, %v305, %v302
    %v313 = vsel %vm311, %v303, %v305
    %v314 = vadd.f32 %v312, %v313
    %v315 = vmul.f32 %v314, 0.5
    %v316 = vsub.f32 %v45, %v315
    %v317 = vmax.f32 %v316, 0.0
    %v318 = vsel %vm41, %v317, 0.0
    %319 = vadd.xlane.f32.xlu0 %v318
    %v320 = vpop.xlane.xlu0 %319
    %vm321 = vcmp.gt.f32.partialorder %v320, 1.0
    %v322 = vsel %vm321, %v315, %v312
    %v323 = vsel %vm321, %v313, %v315
    %v324 = vadd.f32 %v322, %v323
    %v325 = vmul.f32 %v324, 0.5
    %v326 = vsub.f32 %v45, %v325
    %v327 = vmax.f32 %v326, 0.0
    %v328 = vsel %vm41, %v327, 0.0
    %329 = vadd.xlane.f32.xlu0 %v328
    %v330 = vpop.xlane.xlu0 %329
    %vm331 = vcmp.gt.f32.partialorder %v330, 1.0
    %v332 = vsel %vm331, %v325, %v322
    %v333 = vsel %vm331, %v323, %v325
    %v334 = vadd.f32 %v332, %v333
    %v335 = vmul.f32 %v334, 0.5
    %v336 = vsub.f32 %v45, %v335
    %v337 = vmax.f32 %v336, 0.0
    %v338 = vsel %vm41, %v337, 0.0
    %339 = vadd.xlane.f32.xlu0 %v338
    %v340 = vpop.xlane.xlu0 %339
    %vm341 = vcmp.gt.f32.partialorder %v340, 1.0
    %v342 = vsel %vm341, %v335, %v332
    %v343 = vsel %vm341, %v333, %v335
    %v344 = vadd.f32 %v342, %v343
    %v345 = vmul.f32 %v344, 0.5
    %vm346 = vcmp.gt.f32.partialorder %v45, %v345
    %v347 = vsel %vm346, 1, 0
    %v348 = vcvt.s32.f32 %v347
    %v349 = vsel %vm41, %v348, 0.0
    %350 = vadd.xlane.f32.xlu0 %v349
    %v351 = vpop.xlane.xlu0 %350
    %v352 = vmax.f32 %v351, 1.0
    %v353 = vmul.f32 %v45, %v348
    %v354 = vsel %vm41, %v353, 0.0
    %355 = vadd.xlane.f32.xlu0 %v354
    %v356 = vpop.xlane.xlu0 %355
    %v357 = vsub.f32 %v356, 1.0
    %v358 = vrcp.pop %v352
    %v359 = vmul.f32 %v357, %v358
    %v360 = vmul.f32 %v45, %v45
    %v361 = vmul.f32 %v359, %v359
    %v362 = vsub.f32 %v360, %v361
    %v363 = vmax.f32 %v362, 0.0
    %v364 = vmul.f32 %v39, %v39
    %v365 = vadd.f32 %v363, %v364
    %v366 = vmul.f32 %v365, 0.5
    %v367 = vmul.f32 %v39, %v45
    %v368 = vsub.f32 %v366, %v367
    %v370 = vlaneseq
    %v371 = vshrl.u32 %v370, 7
    %v372 = vsub.s32 0, %v371
    %v373 = vrot.slane %v40, %v372
    %v375 = vmul.f32 %v368, %v373
    %v376 = vsel %vm41, %v375, 0.0
    %377 = vadd.xlane.f32.xlu0 %v376
    %v378 = vpop.xlane.xlu0 %377
    %vm379 = vcmask 7168
    %380 = vst.msk [vmem:[%s3] sm:$0xff] %vm379, %v378
    // Predicated region
    $region22: #{tpu_custom_call.1} parent=1 // pred_check
      _
    $region23: #{tpu_custom_call.1} parent=1 // pred_check_branch
      %382 = sbr.rel (0) target = $region25
    $region24: #{tpu_custom_call.1} parent=1 // pred_region
      _
    $region25: #{tpu_custom_call.1} parent=1 // pred_fallthru
      _
    // Predicated region
    $region26: #{tpu_custom_call.1} parent=1 // pred_check
      _
    $region27: #{tpu_custom_call.1} parent=1 // pred_check_branch
      %384 = sbr.rel (0) target = $region29
    $region28: #{tpu_custom_call.1} parent=1 // pred_region
      _
    $region29: #{tpu_custom_call.1} parent=1 // pred_fallthru
      _
    %385 = vsyncpa [#allocation3], 1
    %386 = vsyncpa [#allocation5], 1

</llo_original>
